<compile_context>
chip_gen: v7x
topology: tpu7x:2x2x1
jax: 0.10.0
libtpu: 0.0.40
codegen_flags: <defaults>
</compile_context>

<pallas_src>
import math
import functools

import jax
import jax.numpy as jnp
from jax.experimental import pallas as pl
from jax.experimental.pallas import tpu as pltpu

HID1 = 64
HID2 = 32
LANES = 128          # lane-dense weight-slab width
TB_MAX = 2048        # max batch rows per grid step (sweep 512/1024/2048/4096)
SPLIT_MIN = 512      # below this, a single block; above, >=2 blocks (v7x megacore)


def _round_up(a, m):
    return (a + m - 1) // m * m


def q_kernel(x_ref, w_ref, out_ref, *, S, A, r_w1, r_b1, r_w2, r_b2, r_wh, r_bh):
    """Fused fc1->relu->fc2->relu->noisy [A|V] head->dueling combine.

    x_ref   : (tb, S)        batch tile of states
    w_ref   : (R, 128)       single lane-dense slab (all weights, pre-combined noise)
    out_ref : (tb, A)        Q values
    """
    x = x_ref[...]

    # Static row-offset slices of the resident weight slab (no relayout).
    w1 = w_ref[r_w1:r_w1 + S, 0:HID1]          # (S, 64)
    b1 = w_ref[r_b1:r_b1 + 1, 0:HID1]          # (1, 64)
    w2 = w_ref[r_w2:r_w2 + HID1, 0:HID2]       # (64, 32)
    b2 = w_ref[r_b2:r_b2 + 1, 0:HID2]          # (1, 32)
    w_h = w_ref[r_wh:r_wh + HID2, 0:A + 1]     # (32, A+1): cols [0:A)=advantages, [A]=V
    b_h = w_ref[r_bh:r_bh + 1, 0:A + 1]        # (1, A+1)

    h1 = jnp.maximum(jnp.dot(x, w1, preferred_element_type=jnp.float32) + b1, 0.0)
    h2 = jnp.maximum(jnp.dot(h1, w2, preferred_element_type=jnp.float32) + b2, 0.0)
    av = jnp.dot(h2, w_h, preferred_element_type=jnp.float32) + b_h     # (tb, A+1)

    adv = av[:, 0:A]                           # lane-aligned slice
    v = av[:, A:A + 1]
    # Dueling combine: Q = V + (A - mean(A, axis=-1, keepdims=True))
    out_ref[...] = v + (adv - jnp.mean(adv, axis=-1, keepdims=True))


def make_q_params(key, state_space, action_space, sigma_zero=0.5):
    """Deterministic synthetic parameters matching Q.__init__ shapes
    (PyTorch conventions: noisy mu/sigma_W are (out, in))."""
    ks = jax.random.split(key, 8)
    p = {}

    bnd1 = 1.0 / math.sqrt(state_space)
    p["w1"] = jax.random.uniform(ks[0], (state_space, HID1), jnp.float32, -bnd1, bnd1)
    p["b1"] = jax.random.uniform(ks[1], (1, HID1), jnp.float32, -bnd1, bnd1)

    bnd2 = 1.0 / math.sqrt(HID1)
    p["w2"] = jax.random.uniform(ks[2], (HID1, HID2), jnp.float32, -bnd2, bnd2)
    p["b2"] = jax.random.uniform(ks[3], (1, HID2), jnp.float32, -bnd2, bnd2)

    init_mu = 1.0 / math.sqrt(HID2)
    init_sigma = sigma_zero / math.sqrt(HID2)
    # Factorised_noisy_layer(32, 1)
    p["mu_W_v"] = jax.random.uniform(ks[4], (1, HID2), jnp.float32, -init_mu, init_mu)
    p["mu_B_v"] = jax.random.uniform(ks[5], (1, 1), jnp.float32, -init_mu, init_mu)
    p["sigma_W_v"] = jnp.full((1, HID2), init_sigma, jnp.float32)
    p["sigma_B_v"] = jnp.full((1, 1), init_sigma, jnp.float32)
    # Factorised_noisy_layer(32, action_space)
    p["mu_W_a"] = jax.random.uniform(ks[6], (action_space, HID2), jnp.float32,
                                     -init_mu, init_mu)
    p["mu_B_a"] = jax.random.uniform(ks[7], (1, action_space), jnp.float32,
                                     -init_mu, init_mu)
    p["sigma_W_a"] = jnp.full((action_space, HID2), init_sigma, jnp.float32)
    p["sigma_B_a"] = jnp.full((1, action_space), init_sigma, jnp.float32)
    return p


@functools.partial(jax.jit, static_argnames=("action_space",))
def q_forward(x, params, noise, action_space):
    """x: (B, state_space) float32 -> Q values (B, action_space)."""
    B, S = x.shape
    A = action_space
    NA = A + 1

    # ---- grid-invariant noisy-weight combine, hoisted out of the kernel -----
    f = lambda e: jnp.sign(e) * jnp.sqrt(jnp.abs(e))
    w_v = params["mu_W_v"] + params["sigma_W_v"] * (f(noise["eps_i_v"]) * f(noise["eps_j_v"]))  # (1,32)
    b_v = params["mu_B_v"] + params["sigma_B_v"] * f(noise["eps_j_v"])                          # (1,1)
    w_a = params["mu_W_a"] + params["sigma_W_a"] * (f(noise["eps_i_a"]) * f(noise["eps_j_a"]))  # (A,32)
    b_a = params["mu_B_a"] + params["sigma_B_a"] * f(noise["eps_j_a"]).T                        # (1,A)

    # Fused (in, out) head, advantages first then V (keeps adv slice lane-aligned).
    w_h = jnp.concatenate([w_a.T, w_v.T], axis=1)    # (32, A+1)
    b_h = jnp.concatenate([b_a, b_v], axis=1)        # (1, A+1)

    # ---- pack everything into ONE lane-dense (rows, 128) slab ----------------
    Sp = _round_up(S, 8)
    r_w1 = 0
    r_b1 = Sp
    r_w2 = r_b1 + 8
    r_b2 = r_w2 + HID1
    r_wh = r_b2 + 8
    r_bh = r_wh + HID2
    n_rows = r_bh + 8

    def put(a, rows):
        r, c = a.shape
        return jnp.pad(a, ((0, rows - r), (0, LANES - c)))

    slab = jnp.concatenate(
        [put(params["w1"], Sp), put(params["b1"], 8),
         put(params["w2"], HID1), put(params["b2"], 8),
         put(w_h, HID2), put(b_h, 8)], axis=0)        # (n_rows, 128) f32

    # ---- batch tiling: no input padding; ragged last block handled by Pallas -
    if B < SPLIT_MIN:
        tb = B                                            # single full-dim block
    else:
        tb = min(TB_MAX, _round_up(pl.cdiv(B, 2), 8))     # >=2 blocks (v7x megacore)
    n_blocks = pl.cdiv(B, tb)

    kernel = functools.partial(
        q_kernel, S=S, A=A,
        r_w1=r_w1, r_b1=r_b1, r_w2=r_w2, r_b2=r_b2, r_wh=r_wh, r_bh=r_bh)

    flops = 2 * B * (S * HID1 + HID1 * HID2 + HID2 * NA)
    bytes_accessed = B * (S + A) * 4 + n_rows * LANES * 4

    out = pl.pallas_call(
        kernel,
        out_shape=jax.ShapeDtypeStruct((B, A), jnp.float32),
        grid=(n_blocks,),
        in_specs=[
            pl.BlockSpec((tb, S), lambda i: (i, 0)),              # streamed x tile
            pl.BlockSpec((n_rows, LANES), lambda i: (0, 0)),      # resident weights
        ],
        out_specs=pl.BlockSpec((tb, A), lambda i: (i, 0)),
        compiler_params=pltpu.CompilerParams(
            dimension_semantics=("parallel",),
            vmem_limit_bytes=32 * 1024 * 1024),
        cost_estimate=pl.CostEstimate(
            flops=flops, transcendentals=0, bytes_accessed=bytes_accessed),
    )(x, slab)
    # TODO(synk): optional bf16 cast of x/slab for the MXU inputs (halves the
    # B-scaling HBM traffic) kept off to match the f32 reference bit-for-bit.
    return out


if __name__ == "__main__":
    state_space = 8
    action_space = 4
    batch = 2

    key = jax.random.PRNGKey(0)
    k_param, k_x, k_ni_v, k_nj_v, k_ni_a, k_nj_a, k_x2 = jax.random.split(key, 7)

    params = make_q_params(k_param, state_space, action_space)

    # Factorised noise, resampled (deterministically here) each forward call,
    # mirroring eps_i.normal_() / eps_j.normal_() in the reference module.
    noise = {
        "eps_i_v": jax.random.normal(k_ni_v, (1, HID2), jnp.float32),
        "eps_j_v": jax.random.normal(k_nj_v, (1, 1), jnp.float32),
        "eps_i_a": jax.random.normal(k_ni_a, (1, HID2), jnp.float32),
        "eps_j_a": jax.random.normal(k_nj_a, (action_space, 1), jnp.float32),
    }

    # Pure-JAX reference of the same math (PyTorch conventions).
    def ref(x):
        h1 = jnp.maximum(x @ params["w1"] + params["b1"], 0.0)
        h2 = jnp.maximum(h1 @ params["w2"] + params["b2"], 0.0)
        f = lambda e: jnp.sign(e) * jnp.sqrt(jnp.abs(e))
        w_v = params["mu_W_v"] + params["sigma_W_v"] * (f(noise["eps_i_v"]) * f(noise["eps_j_v"]))
        b_v = params["mu_B_v"] + params["sigma_B_v"] * f(noise["eps_j_v"]).T
        v = h2 @ w_v.T + b_v
        w_a = params["mu_W_a"] + params["sigma_W_a"] * (f(noise["eps_i_a"]) * f(noise["eps_j_a"]))
        b_a = params["mu_B_a"] + params["sigma_B_a"] * f(noise["eps_j_a"]).T
        a = h2 @ w_a.T + b_a
        return v + (a - jnp.mean(a, axis=-1, keepdims=True))

    # Small-shape check (single block).
    x = jax.random.normal(k_x, (batch, state_space), jnp.float32)
    q = jax.block_until_ready(q_forward(x, params, noise, action_space))
    assert jnp.allclose(q, ref(x), atol=1e-5, rtol=1e-5), "mismatch vs reference (small)"

    # Ragged / multi-block check (2 blocks, last block partially out of bounds;
    # also exercises the v7x 2-TC split path).
    x2 = jax.random.normal(k_x2, (1030, state_space), jnp.float32)
    q2 = jax.block_until_ready(q_forward(x2, params, noise, action_space))
    assert q2.shape == (1030, action_space)
    assert jnp.allclose(q2, ref(x2), atol=1e-5, rtol=1e-5), "mismatch vs reference (ragged)"

    print("KERNEL_OK")
</pallas_src>

<mosaic_0001>
module attributes {stable_mosaic.version = 11 : i64} {
  func.func @q_kernel(%arg0: i32, %arg1: memref<2x8xf32, #tpu.memory_space<vmem>>, %arg2: memref<128x128xf32, #tpu.memory_space<vmem>>, %arg3: memref<2x4xf32, #tpu.memory_space<vmem>>) attributes {dimension_semantics = [#tpu.dimension_semantics<parallel>], iteration_bounds = array<i64: 1>, scalar_prefetch = 0 : i64, scratch_operands = 0 : i64, tpu.core_type = #tpu.core_type<tc>, window_params = [{transform_indices = @transform_0, window_bounds = array<i64: 2, 8>}, {pipeline_mode = #tpu.pipeline_mode<synchronous>, transform_indices = @transform_1, window_bounds = array<i64: 128, 128>}, {transform_indices = @transform_2, window_bounds = array<i64: 2, 4>}]} {
    %c0 = arith.constant 0 : index
    %c0_0 = arith.constant 0 : index
    %0 = vector.load %arg1[%c0, %c0_0] : memref<2x8xf32, #tpu.memory_space<vmem>>, vector<2x8xf32>
    %c0_1 = arith.constant 0 : index
    %c0_2 = arith.constant 0 : index
    %1 = vector.load %arg2[%c0_1, %c0_2] : memref<128x128xf32, #tpu.memory_space<vmem>>, vector<8x64xf32>
    %c8 = arith.constant 8 : index
    %c0_3 = arith.constant 0 : index
    %2 = vector.load %arg2[%c8, %c0_3] : memref<128x128xf32, #tpu.memory_space<vmem>>, vector<1x64xf32>
    %c16 = arith.constant 16 : index
    %c0_4 = arith.constant 0 : index
    %3 = vector.load %arg2[%c16, %c0_4] : memref<128x128xf32, #tpu.memory_space<vmem>>, vector<64x32xf32>
    %c80 = arith.constant 80 : index
    %c0_5 = arith.constant 0 : index
    %4 = vector.load %arg2[%c80, %c0_5] : memref<128x128xf32, #tpu.memory_space<vmem>>, vector<1x32xf32>
    %c88 = arith.constant 88 : index
    %c0_6 = arith.constant 0 : index
    %5 = vector.load %arg2[%c88, %c0_6] : memref<128x128xf32, #tpu.memory_space<vmem>>, vector<32x5xf32>
    %c120 = arith.constant 120 : index
    %c0_7 = arith.constant 0 : index
    %6 = vector.load %arg2[%c120, %c0_7] : memref<128x128xf32, #tpu.memory_space<vmem>>, vector<1x5xf32>
    %cst = arith.constant dense<0.000000e+00> : vector<2x64xf32>
    %7 = tpu.matmul %0, %1, %cst {dimension_numbers = #tpu.dot_dimension_numbers<[1], [0], [0], [1], [0, 0, 1, 1], [], []>} : vector<2x8xf32>, vector<8x64xf32>, vector<2x64xf32> -> vector<2x64xf32>
    %8 = vector.broadcast %2 : vector<1x64xf32> to vector<2x64xf32>
    %9 = arith.addf %7, %8 : vector<2x64xf32>
    %cst_8 = arith.constant 0.000000e+00 : f32
    %10 = vector.broadcast %cst_8 : f32 to vector<2x64xf32>
    %11 = arith.maximumf %9, %10 : vector<2x64xf32>
    %cst_9 = arith.constant dense<0.000000e+00> : vector<2x32xf32>
    %12 = tpu.matmul %11, %3, %cst_9 {dimension_numbers = #tpu.dot_dimension_numbers<[1], [0], [0], [1], [0, 0, 1, 1], [], []>} : vector<2x64xf32>, vector<64x32xf32>, vector<2x32xf32> -> vector<2x32xf32>
    %13 = vector.broadcast %4 : vector<1x32xf32> to vector<2x32xf32>
    %14 = arith.addf %12, %13 : vector<2x32xf32>
    %cst_10 = arith.constant 0.000000e+00 : f32
    %15 = vector.broadcast %cst_10 : f32 to vector<2x32xf32>
    %16 = arith.maximumf %14, %15 : vector<2x32xf32>
    %cst_11 = arith.constant dense<0.000000e+00> : vector<2x5xf32>
    %17 = tpu.matmul %16, %5, %cst_11 {dimension_numbers = #tpu.dot_dimension_numbers<[1], [0], [0], [1], [0, 0, 1, 1], [], []>} : vector<2x32xf32>, vector<32x5xf32>, vector<2x5xf32> -> vector<2x5xf32>
    %18 = vector.broadcast %6 : vector<1x5xf32> to vector<2x5xf32>
    %19 = arith.addf %17, %18 : vector<2x5xf32>
    %20 = vector.extract_strided_slice %19 {offsets = [0, 0], sizes = [2, 4], strides = [1, 1]} : vector<2x5xf32> to vector<2x4xf32>
    %21 = vector.extract_strided_slice %19 {offsets = [0, 4], sizes = [2, 1], strides = [1, 1]} : vector<2x5xf32> to vector<2x1xf32>
    %cst_12 = arith.constant dense<0.000000e+00> : vector<2xf32>
    %22 = vector.multi_reduction <add>, %20, %cst_12 [1] : vector<2x4xf32> to vector<2xf32>
    %23 = vector.shape_cast %22 : vector<2xf32> to vector<2x1xf32>
    %cst_13 = arith.constant 4.000000e+00 : f32
    %24 = vector.broadcast %cst_13 : f32 to vector<2x1xf32>
    %25 = arith.divf %23, %24 : vector<2x1xf32>
    %26 = vector.broadcast %25 : vector<2x1xf32> to vector<2x4xf32>
    %27 = arith.subf %20, %26 : vector<2x4xf32>
    %28 = vector.broadcast %21 : vector<2x1xf32> to vector<2x4xf32>
    %29 = arith.addf %28, %27 : vector<2x4xf32>
    %c0_14 = arith.constant 0 : index
    %c0_15 = arith.constant 0 : index
    %30 = vector.load %arg3[%c0_14, %c0_15] : memref<2x4xf32, #tpu.memory_space<vmem>>, vector<2x4xf32>
    tpu.vector_store %arg3[%c0_14, %c0_15], %29 {strides = array<i32>} : memref<2x4xf32, #tpu.memory_space<vmem>>, vector<2x4xf32>,
    return
  }
  func.func @transform_0(%arg0: i32) -> (i32, i32) {
    %c0_i32 = arith.constant 0 : i32
    %c0_i32_0 = arith.constant 0 : i32
    return %arg0, %c0_i32 : i32, i32
  }
  func.func @transform_1(%arg0: i32) -> (i32, i32) {
    %c0_i32 = arith.constant 0 : i32
    %c0_i32_0 = arith.constant 0 : i32
    %c0_i32_1 = arith.constant 0 : i32
    return %c0_i32, %c0_i32_0 : i32, i32
  }
  func.func @transform_2(%arg0: i32) -> (i32, i32) {
    %c0_i32 = arith.constant 0 : i32
    %c0_i32_0 = arith.constant 0 : i32
    return %arg0, %c0_i32 : i32, i32
  }
}

</mosaic_0001>

<llo_original>
// kernel: q_forward.1
$region0: #{q_forward.1}
  #allocation0 [shape = 'u32[]', space=smem, size = 0x4, offset = 0x4, fixed_abs, tag = 'smem constant byte address 0x4 - core index']
  #allocation1 [shape = 'u32[144,128]{1,0:T(1,128)}', space=vmem, size = 0x12000, scoped, tag = 'internal scratch']
  %s0 = inlined_call_operand.vmem [shape: f32[2,8], index: 0, kind: input, shape index: {}]
  %s1 = inlined_call_operand.vmem [shape: f32[128,128], index: 1, kind: input, shape index: {}]
  %s2 = inlined_call_operand.hbm [shape: f32[2,4], index: 2, kind: output, shape index: {}]
  %s3 = sld [smem:[#allocation0]]
  $region18: #{q_forward.1} parent=0
    _
  %s5 = ssub.s32 1, %s3
  %s6 = scalar_select 0, %s5, %s3
  $region1: #{q_forward.1} parent=0
    #allocation2 [shape = 'u8[1024]{0}', space=vmem, size = 0x400, scoped, tag = 'output window, operand 0, single buffered']
    #allocation3 [shape = 's32[1]{0}', space=sflag, size = 0x4, scoped, tag = 'scoped memory for q_forward.1']
    %7 = vsyncpa [#allocation3], 0
    // Predicated region
    $region2: #{q_forward.1} parent=1 // pred_check
      _
    $region3: #{q_forward.1} parent=1 // pred_check_branch
      %9 = sbr.rel (0) target = $region5
    $region4: #{q_forward.1} parent=1 // pred_region
      _
    $region5: #{q_forward.1} parent=1 // pred_fallthru
      _
    // Predicated region
    $region6: #{q_forward.1} parent=1 // pred_check
      _
    $region7: #{q_forward.1} parent=1 // pred_check_branch
      %11 = sbr.rel (0) target = $region9
    $region8: #{q_forward.1} parent=1 // pred_region
      _
    $region9: #{q_forward.1} parent=1 // pred_fallthru
      _
    %v12 = vld [vmem:[%s0] sm:$0x3]
    %v13 = vld [vmem:[%s1] sm:$0xff]
    %v14 = vld [vmem:[%s1 + $0x8] sm:$0x1]
    %v15 = vld [vmem:[%s1 + $0x10] sm:$0xff]
    %v16 = vld [vmem:[%s1 + $0x18] sm:$0xff]
    %v17 = vld [vmem:[%s1 + $0x20] sm:$0xff]
    %v18 = vld [vmem:[%s1 + $0x28] sm:$0xff]
    %v19 = vld [vmem:[%s1 + $0x30] sm:$0xff]
    %v20 = vld [vmem:[%s1 + $0x38] sm:$0xff]
    %v21 = vld [vmem:[%s1 + $0x40] sm:$0xff]
    %v22 = vld [vmem:[%s1 + $0x48] sm:$0xff]
    %v23 = vld [vmem:[%s1 + $0x50] sm:$0x1]
    %v24 = vld [vmem:[%s1 + $0x58] sm:$0xff]
    %v25 = vld [vmem:[%s1 + $0x60] sm:$0xff]
    %v26 = vld [vmem:[%s1 + $0x68] sm:$0xff]
    %v27 = vld [vmem:[%s1 + $0x70] sm:$0xff]
    %v28 = vld [vmem:[%s1 + $0x78] sm:$0x1]
    %v29 = vlaneseq
    %v30 = vshrl.u32 %v29, 7
    %v31 = vsub.s32 0, %v30
    %v32 = vrot.slane %v14, %v31
    %vm33 = vcmask 64512
    %v35 = vsel %vm33, %v12, 0
    %37 = vmatprep.subr.mxu0 0.0
    %38 = vmatpush1.msra.mxu0 %v13
    %39 = vmatprep.subr.mxu0 0.0
    %40 = vmatpush1.msra.mxu0 0.0
    %41 = vmatprep.subr.mxu0 0.0
    %42 = vmatpush1.msra.mxu0 0.0
    %43 = vmatprep.subr.mxu0 0.0
    %44 = vmatpush1.msra.mxu0 0.0
    %45 = vmatprep.subr.mxu0 0.0
    %46 = vmatpush1.msra.mxu0 0.0
    %47 = vmatprep.subr.mxu0 0.0
    %48 = vmatpush1.msra.mxu0 0.0
    %49 = vmatprep.subr.mxu0 0.0
    %50 = vmatpush1.msra.mxu0 0.0
    %51 = vmatprep.subr.mxu0 0.0
    %52 = vmatpush1.msra.mxu0 0.0
    %53 = vmatprep.subr.mxu0 0.0
    %54 = vmatpush1.msra.mxu0 0.0
    %55 = vmatprep.subr.mxu0 0.0
    %56 = vmatpush1.msra.mxu0 0.0
    %57 = vmatprep.subr.mxu0 0.0
    %58 = vmatpush1.msra.mxu0 0.0
    %59 = vmatprep.subr.mxu0 0.0
    %60 = vmatpush1.msra.mxu0 0.0
    %61 = vmatprep.subr.mxu0 0.0
    %62 = vmatpush1.msra.mxu0 0.0
    %63 = vmatprep.subr.mxu0 0.0
    %64 = vmatpush1.msra.mxu0 0.0
    %65 = vmatprep.subr.mxu0 0.0
    %66 = vmatpush1.msra.mxu0 0.0
    %67 = vmatprep.subr.mxu0 0.0
    %68 = vmatpush1.msra.mxu0 0.0
    %69 = vmatprep.subr.mxu0 0.0
    %70 = vmatpush1.msra.mxu0 0.0
    %71 = vmatprep.subr.mxu0 0.0
    %72 = vmatpush1.msra.mxu0 0.0
    %73 = vmatprep.subr.mxu0 0.0
    %74 = vmatpush1.msra.mxu0 0.0
    %75 = vmatprep.subr.mxu0 0.0
    %76 = vmatpush1.msra.mxu0 0.0
    %77 = vmatprep.subr.mxu0 0.0
    %78 = vmatpush1.msra.mxu0 0.0
    %79 = vmatprep.subr.mxu0 0.0
    %80 = vmatpush1.msra.mxu0 0.0
    %81 = vmatprep.subr.mxu0 0.0
    %82 = vmatpush1.msra.mxu0 0.0
    %83 = vmatprep.subr.mxu0 0.0
    %84 = vmatpush1.msra.mxu0 0.0
    %85 = vmatprep.subr.mxu0 0.0
    %86 = vmatpush1.msra.mxu0 0.0
    %87 = vmatprep.subr.mxu0 0.0
    %88 = vmatpush1.msra.mxu0 0.0
    %89 = vmatprep.subr.mxu0 0.0
    %90 = vmatpush1.msra.mxu0 0.0
    %91 = vmatprep.subr.mxu0 0.0
    %92 = vmatpush1.msra.mxu0 0.0
    %93 = vmatprep.subr.mxu0 0.0
    %94 = vmatpush1.msra.mxu0 0.0
    %95 = vmatprep.subr.mxu0 0.0
    %96 = vmatpush1.msra.mxu0 0.0
    %97 = vmatprep.subr.mxu0 0.0
    %98 = vmatpush1.msra.mxu0 0.0
    %99 = vmatprep.subr.mxu0 0.0
    %100 = vmatpush1.msra.mxu0 0.0
    %101 = vmatprep.mubr.f32.mxu0 0.0
    %102 = vmatmul.mubr.f32.gmra.mrb[0].mxu0 %v35
    %v103 = vpop.f32.mrb[0].mxu0
    %v104 = vadd.f32 %v32, %v103
    %v105 = vpop.f32.mrb[0].mxu0
    %106 = vdwg.mxu0
    %v107 = vmax.f32 %v104, 0.0
    %v108 = vlaneseq
    %v109 = vshrl.u32 %v108, 7
    %v110 = vsub.s32 0, %v109
    %v111 = vrot.slane %v23, %v110
    %vm112 = vcmask 523264
    %v114 = vsel %vm112, %v107, 0
    %116 = vmatprep.subr.mxu0 0.0
    %117 = vmatpush1.msra.mxu0 %v15
    %118 = vmatprep.subr.mxu0 0.0
    %119 = vmatpush1.msra.mxu0 %v16
    %120 = vmatprep.subr.mxu0 0.0
    %121 = vmatpush1.msra.mxu0 %v17
    %122 = vmatprep.subr.mxu0 0.0
    %123 = vmatpush1.msra.mxu0 %v18
    %124 = vmatprep.subr.mxu0 0.0
    %125 = vmatpush1.msra.mxu0 %v19
    %126 = vmatprep.subr.mxu0 0.0
    %127 = vmatpush1.msra.mxu0 %v20
    %128 = vmatprep.subr.mxu0 0.0
    %129 = vmatpush1.msra.mxu0 %v21
    %130 = vmatprep.subr.mxu0 0.0
    %131 = vmatpush1.msra.mxu0 %v22
    %132 = vmatprep.subr.mxu0 0.0
    %133 = vmatpush1.msra.mxu0 0.0
    %134 = vmatprep.subr.mxu0 0.0
    %135 = vmatpush1.msra.mxu0 0.0
    %136 = vmatprep.subr.mxu0 0.0
    %137 = vmatpush1.msra.mxu0 0.0
    %138 = vmatprep.subr.mxu0 0.0
    %139 = vmatpush1.msra.mxu0 0.0
    %140 = vmatprep.subr.mxu0 0.0
    %141 = vmatpush1.msra.mxu0 0.0
    %142 = vmatprep.subr.mxu0 0.0
    %143 = vmatpush1.msra.mxu0 0.0
    %144 = vmatprep.subr.mxu0 0.0
    %145 = vmatpush1.msra.mxu0 0.0
    %146 = vmatprep.subr.mxu0 0.0
    %147 = vmatpush1.msra.mxu0 0.0
    %148 = vmatprep.subr.mxu0 0.0
    %149 = vmatpush1.msra.mxu0 0.0
    %150 = vmatprep.subr.mxu0 0.0
    %151 = vmatpush1.msra.mxu0 0.0
    %152 = vmatprep.subr.mxu0 0.0
    %153 = vmatpush1.msra.mxu0 0.0
    %154 = vmatprep.subr.mxu0 0.0
    %155 = vmatpush1.msra.mxu0 0.0
    %156 = vmatprep.subr.mxu0 0.0
    %157 = vmatpush1.msra.mxu0 0.0
    %158 = vmatprep.subr.mxu0 0.0
    %159 = vmatpush1.msra.mxu0 0.0
    %160 = vmatprep.subr.mxu0 0.0
    %161 = vmatpush1.msra.mxu0 0.0
    %162 = vmatprep.subr.mxu0 0.0
    %163 = vmatpush1.msra.mxu0 0.0
    %164 = vmatprep.subr.mxu0 0.0
    %165 = vmatpush1.msra.mxu0 0.0
    %166 = vmatprep.subr.mxu0 0.0
    %167 = vmatpush1.msra.mxu0 0.0
    %168 = vmatprep.subr.mxu0 0.0
    %169 = vmatpush1.msra.mxu0 0.0
    %170 = vmatprep.subr.mxu0 0.0
    %171 = vmatpush1.msra.mxu0 0.0
    %172 = vmatprep.subr.mxu0 0.0
    %173 = vmatpush1.msra.mxu0 0.0
    %174 = vmatprep.subr.mxu0 0.0
    %175 = vmatpush1.msra.mxu0 0.0
    %176 = vmatprep.subr.mxu0 0.0
    %177 = vmatpush1.msra.mxu0 0.0
    %178 = vmatprep.subr.mxu0 0.0
    %179 = vmatpush1.msra.mxu0 0.0
    %180 = vmatprep.mubr.f32.mxu0 0.0
    %181 = vmatmul.mubr.f32.gmra.mrb[0].mxu0 %v114
    %v182 = vpop.f32.mrb[0].mxu0
    %v183 = vadd.f32 %v111, %v182
    %v184 = vpop.f32.mrb[0].mxu0
    %185 = vdwg.mxu0
    %v186 = vmax.f32 %v183, 0.0
    %v187 = vlaneseq
    %v188 = vshrl.u32 %v187, 7
    %v189 = vsub.s32 0, %v188
    %v190 = vrot.slane %v28, %v189
    %vm191 = vcmask 261120
    %v193 = vsel %vm191, %v186, 0
    %195 = vmatprep.subr.mxu0 0.0
    %196 = vmatpush1.msra.mxu0 %v24
    %197 = vmatprep.subr.mxu0 0.0
    %198 = vmatpush1.msra.mxu0 %v25
    %199 = vmatprep.subr.mxu0 0.0
    %200 = vmatpush1.msra.mxu0 %v26
    %201 = vmatprep.subr.mxu0 0.0
    %202 = vmatpush1.msra.mxu0 %v27
    %203 = vmatprep.subr.mxu0 0.0
    %204 = vmatpush1.msra.mxu0 0.0
    %205 = vmatprep.subr.mxu0 0.0
    %206 = vmatpush1.msra.mxu0 0.0
    %207 = vmatprep.subr.mxu0 0.0
    %208 = vmatpush1.msra.mxu0 0.0
    %209 = vmatprep.subr.mxu0 0.0
    %210 = vmatpush1.msra.mxu0 0.0
    %211 = vmatprep.subr.mxu0 0.0
    %212 = vmatpush1.msra.mxu0 0.0
    %213 = vmatprep.subr.mxu0 0.0
    %214 = vmatpush1.msra.mxu0 0.0
    %215 = vmatprep.subr.mxu0 0.0
    %216 = vmatpush1.msra.mxu0 0.0
    %217 = vmatprep.subr.mxu0 0.0
    %218 = vmatpush1.msra.mxu0 0.0
    %219 = vmatprep.subr.mxu0 0.0
    %220 = vmatpush1.msra.mxu0 0.0
    %221 = vmatprep.subr.mxu0 0.0
    %222 = vmatpush1.msra.mxu0 0.0
    %223 = vmatprep.subr.mxu0 0.0
    %224 = vmatpush1.msra.mxu0 0.0
    %225 = vmatprep.subr.mxu0 0.0
    %226 = vmatpush1.msra.mxu0 0.0
    %227 = vmatprep.subr.mxu0 0.0
    %228 = vmatpush1.msra.mxu0 0.0
    %229 = vmatprep.subr.mxu0 0.0
    %230 = vmatpush1.msra.mxu0 0.0
    %231 = vmatprep.subr.mxu0 0.0
    %232 = vmatpush1.msra.mxu0 0.0
    %233 = vmatprep.subr.mxu0 0.0
    %234 = vmatpush1.msra.mxu0 0.0
    %235 = vmatprep.subr.mxu0 0.0
    %236 = vmatpush1.msra.mxu0 0.0
    %237 = vmatprep.subr.mxu0 0.0
    %238 = vmatpush1.msra.mxu0 0.0
    %239 = vmatprep.subr.mxu0 0.0
    %240 = vmatpush1.msra.mxu0 0.0
    %241 = vmatprep.subr.mxu0 0.0
    %242 = vmatpush1.msra.mxu0 0.0
    %243 = vmatprep.subr.mxu0 0.0
    %244 = vmatpush1.msra.mxu0 0.0
    %245 = vmatprep.subr.mxu0 0.0
    %246 = vmatpush1.msra.mxu0 0.0
    %247 = vmatprep.subr.mxu0 0.0
    %248 = vmatpush1.msra.mxu0 0.0
    %249 = vmatprep.subr.mxu0 0.0
    %250 = vmatpush1.msra.mxu0 0.0
    %251 = vmatprep.subr.mxu0 0.0
    %252 = vmatpush1.msra.mxu0 0.0
    %253 = vmatprep.subr.mxu0 0.0
    %254 = vmatpush1.msra.mxu0 0.0
    %255 = vmatprep.subr.mxu0 0.0
    %256 = vmatpush1.msra.mxu0 0.0
    %257 = vmatprep.subr.mxu0 0.0
    %258 = vmatpush1.msra.mxu0 0.0
    %259 = vmatprep.mubr.f32.mxu0 0.0
    %260 = vmatmul.mubr.f32.gmra.mrb[0].mxu0 %v193
    %v261 = vpop.f32.mrb[0].mxu0
    %v262 = vadd.f32 %v190, %v261
    %v263 = vpop.f32.mrb[0].mxu0
    %264 = vdwg.mxu0
    %vm265 = vcmask 25600
    %v266 = vsel %vm265, %v262, 0.0
    %267 = vadd.xlane.f32.xlu0 %v266
    %v268 = vpop.xlane.xlu0 %267
    %v269 = vrcp.pop 4.0
    %v270 = vmul.f32 %v268, %v269
    %v271 = vsub.f32 %v262, %v270
    %273 = vset.pattern.permute.xlu0 4
    %274 = vperm.xlu0 %273, %v262
    %v275 = vpop.permute.xlu0 %274
    %v277 = vadd.f32 %v275, %v271
    %278 = vst.msk [vmem:[#allocation2] sm:$0x3] %vm265, %v277
    // Predicated region
    $region10: #{q_forward.1} parent=1 // pred_check
      _
    $region11: #{q_forward.1} parent=1 // pred_check_branch
      %280 = sbr.rel (0) target = $region13
    $region12: #{q_forward.1} parent=1 // pred_region
      %s282 = ssub.s32 32, 32
      %283 = vsyncadd [#allocation3], %s282
      %s285 = sshll.u32 [#allocation2], 4
      %s286 = int_to_ptr.vmem [resolvable:$true] %s285
      %288 = dma.vmem_to_hbm [thread:$0]  %s286, 32, %s2, [#allocation3]
    $region13: #{q_forward.1} parent=1 // pred_fallthru
      _
    // Predicated region
    $region14: #{q_forward.1} parent=1 // pred_check
      _
    $region15: #{q_forward.1} parent=1 // pred_check_branch
      %290 = sbr.rel (0) target = $region17
    $region16: #{q_forward.1} parent=1 // pred_region
      %291 = dma.done [#allocation3], 32
    $region17: #{q_forward.1} parent=1 // pred_fallthru
      _
    %292 = vsyncpa [#allocation3], 1

</llo_original>
